<compile_context>
chip_gen: v5e
topology: v5e:2x2
jax: 0.10.0
libtpu: 0.0.40
codegen_flags: <defaults>
</compile_context>

<pallas_src>
import functools

import jax
import jax.numpy as jnp
from jax import lax
from jax.experimental import pallas as pl
from jax.experimental.pallas import tpu as pltpu


def _round_up(x, m):
    return (x + m - 1) // m * m


def _pick_tile_n(n, *, max_tile=2048, min_grid=4):
    """Batch tile: big (amortize ~0.35us/grid-step), multiple of 128 (so the
    lane-dense output block obeys the (8,128) rule), but keep >= min_grid grid
    steps when n allows it so v7x's two TensorCores both get work."""
    tile = _round_up(pl.cdiv(max(n, 1), min_grid), 128)
    return max(128, min(max_tile, tile))


# ---------------------------------------------------------------------------
# Kernel (feature-major: activations are [features, TILE_N])
# ---------------------------------------------------------------------------
def critic_kernel(
    state_ref,                    # [TILE_N, SD]
    action_ref,                   # [TILE_N, AD]
    ws1_ref, bs1_ref,             # [H, SD], [H, 1]
    wa1_ref, ba1_ref,             # [H, AD], [H, 1]
    ws2_ref, bs2_ref,             # [H, H],  [H, 1]
    w2s_ref, w2a_ref, b2_ref,     # [H, H], [H, H], [H, 1]
    w3_ref, b3_ref,               # [H, H],  [H, 1]
    w4_ref, b4_ref,               # [1, H],  [1, 1]
    out_ref,                      # [1, TILE_N]   (lane-dense)
):
    f32 = jnp.float32
    # Contract a feature-major weight [H, F] against a batch-major input tile
    # [TILE_N, F] on their last dims (the classic q @ k.T pattern):
    #   result[h, j] = sum_f W[h, f] * X[j, f]     -> [H, TILE_N]
    dn = (((1,), (1,)), ((), ()))

    a1 = jnp.maximum(
        lax.dot_general(wa1_ref[...], action_ref[...], dn,
                        preferred_element_type=f32) + ba1_ref[...], 0.0)
    s1 = jnp.maximum(
        lax.dot_general(ws1_ref[...], state_ref[...], dn,
                        preferred_element_type=f32) + bs1_ref[...], 0.0)
    s2 = jnp.maximum(
        jnp.dot(ws2_ref[...], s1, preferred_element_type=f32)
        + bs2_ref[...], 0.0)

    # fc2 on the (virtual) concat [s2 ; a1]: W2 split into its two halves.
    x = jnp.maximum(
        jnp.dot(w2s_ref[...], s2, preferred_element_type=f32)
        + jnp.dot(w2a_ref[...], a1, preferred_element_type=f32)
        + b2_ref[...], 0.0)

    x = jnp.maximum(
        jnp.dot(w3_ref[...], x, preferred_element_type=f32)
        + b3_ref[...], 0.0)

    q = jnp.dot(w4_ref[...], x, preferred_element_type=f32) + b4_ref[...]
    out_ref[...] = q.astype(out_ref.dtype)      # dense (1, TILE_N) store


# ---------------------------------------------------------------------------
# Parameter packing (done once, outside the jitted forward)
# ---------------------------------------------------------------------------
def pack_params(p):
    """Feature-major ([out, in]) weights and [out, 1] biases for the kernel."""
    t = lambda w: jnp.asarray(w, jnp.float32).T
    col = lambda b: jnp.asarray(b, jnp.float32).reshape(-1, 1)
    H = p["w_s2"].shape[0]
    return (
        t(p["w_s1"]), col(p["b_s1"]),
        t(p["w_a1"]), col(p["b_a1"]),
        t(p["w_s2"]), col(p["b_s2"]),
        t(p["w2"][:H]), t(p["w2"][H:]), col(p["b2"]),
        t(p["w3"]), col(p["b3"]),
        t(p["w4"]), col(p["b4"]),
    )


# ---------------------------------------------------------------------------
# Wrapper
# ---------------------------------------------------------------------------
@functools.partial(jax.jit, static_argnames=("tile_n",))
def critic_forward(state, action, fused, *, tile_n=None):
    """Q(s, a) -> [n, 1]."""
    n, sd = state.shape
    ad = action.shape[1]
    H = fused[0].shape[0]

    if tile_n is None:
        tile_n = _pick_tile_n(n)
    num_tiles = pl.cdiv(n, tile_n)
    n_pad = num_tiles * tile_n        # output only; inputs stay unpadded

    def batch_spec(cols):
        return pl.BlockSpec((tile_n, cols), lambda i: (i, 0))

    def resident_spec(arr):
        # Constant index_map: DMA'd once, resident in VMEM across all tiles.
        return pl.BlockSpec(arr.shape, lambda i: (0, 0))

    in_specs = ([batch_spec(sd), batch_spec(ad)]
                + [resident_spec(w) for w in fused])
    out_spec = pl.BlockSpec((1, tile_n), lambda i: (0, i))

    flops = 2 * n * (sd * H + ad * H + H * H + 2 * H * H + H * H + H)
    bytes_accessed = (n * (sd + ad) * 4 + n_pad * 4
                      + sum(int(w.size) * 4 for w in fused))
    cost = pl.CostEstimate(flops=int(flops), transcendentals=0,
                           bytes_accessed=int(bytes_accessed))

    q = pl.pallas_call(
        critic_kernel,
        out_shape=jax.ShapeDtypeStruct((1, n_pad), jnp.float32),
        grid=(num_tiles,),
        in_specs=in_specs,
        out_specs=out_spec,
        compiler_params=pltpu.CompilerParams(
            dimension_semantics=("parallel",)),   # v7x: shard batch over 2 TCs
        cost_estimate=cost,
    )(state.astype(jnp.float32), action.astype(jnp.float32), *fused)

    return q.reshape(n_pad, 1)[:n]


# ---------------------------------------------------------------------------
# Parameter init (mimics the PyTorch module's init scheme; weights stored
# as [in_features, out_features] in this dict).
# ---------------------------------------------------------------------------
def init_params(key, state_dim, action_dim, neurons):
    import numpy as np

    keys = jax.random.split(key, 12)

    def uni(k, shape, lo, hi):
        return jax.random.uniform(k, shape, jnp.float32, lo, hi)

    H = neurons
    # fanin_init in the reference uses weight.size()[0] == out_features (quirk kept).
    v = 1.0 / np.sqrt(H)

    def bb(fan_in):  # PyTorch default Linear bias bound
        return 1.0 / np.sqrt(fan_in)

    return {
        "w_s1": uni(keys[0], (state_dim, H), -v, v),
        "b_s1": uni(keys[1], (1, H), -bb(state_dim), bb(state_dim)),
        "w_s2": uni(keys[2], (H, H), -v, v),
        "b_s2": uni(keys[3], (1, H), -bb(H), bb(H)),
        "w_a1": uni(keys[4], (action_dim, H), -bb(action_dim), bb(action_dim)),
        "b_a1": uni(keys[5], (1, H), -bb(action_dim), bb(action_dim)),
        "w2":   uni(keys[6], (2 * H, H), -v, v),
        "b2":   uni(keys[7], (1, H), -bb(2 * H), bb(2 * H)),
        "w3":   uni(keys[8], (H, H), -v, v),
        "b3":   uni(keys[9], (1, H), -bb(H), bb(H)),
        "w4":   uni(keys[10], (H, 1), -0.003, 0.003),
        "b4":   uni(keys[11], (1, 1), -bb(H), bb(H)),
    }


if __name__ == "__main__":
    # fc2 = nn.Linear(40, neurons) forces 2*neurons == 40 -> neurons = 20.
    state_dim, action_dim, neurons = 8, 4, 20
    n = 1000     # not a multiple of the tile -> exercises the ragged last tile

    key = jax.random.PRNGKey(0)
    k_state, k_action, k_params = jax.random.split(key, 3)

    state = jax.random.normal(k_state, (n, state_dim), jnp.float32)
    action = jax.random.normal(k_action, (n, action_dim), jnp.float32)
    params = init_params(k_params, state_dim, action_dim, neurons)
    fused = pack_params(params)

    q = critic_forward(state, action, fused)
    q = jax.block_until_ready(q)

    # Pure-JAX reference of the ORIGINAL (unfused) module math.
    def ref(state, action, p):
        s1 = jax.nn.relu(state @ p["w_s1"] + p["b_s1"])
        s2 = jax.nn.relu(s1 @ p["w_s2"] + p["b_s2"])
        a1 = jax.nn.relu(action @ p["w_a1"] + p["b_a1"])
        x = jnp.concatenate([s2, a1], axis=1)
        x = jax.nn.relu(x @ p["w2"] + p["b2"])
        x = jax.nn.relu(x @ p["w3"] + p["b3"])
        return x @ p["w4"] + p["b4"]

    expected = ref(state, action, params)
    assert q.shape == (n, 1), q.shape
    assert jnp.allclose(q, expected, atol=1e-4, rtol=1e-4), (
        float(jnp.max(jnp.abs(q - expected))))
    print("KERNEL_OK")
</pallas_src>

<mosaic_0001>
module attributes {stable_mosaic.version = 11 : i64} {
  func.func @critic_kernel(%arg0: i32, %arg1: memref<256x8xf32, #tpu.memory_space<vmem>>, %arg2: memref<256x4xf32, #tpu.memory_space<vmem>>, %arg3: memref<20x8xf32, #tpu.memory_space<vmem>>, %arg4: memref<20x1xf32, #tpu.memory_space<vmem>>, %arg5: memref<20x4xf32, #tpu.memory_space<vmem>>, %arg6: memref<20x1xf32, #tpu.memory_space<vmem>>, %arg7: memref<20x20xf32, #tpu.memory_space<vmem>>, %arg8: memref<20x1xf32, #tpu.memory_space<vmem>>, %arg9: memref<20x20xf32, #tpu.memory_space<vmem>>, %arg10: memref<20x20xf32, #tpu.memory_space<vmem>>, %arg11: memref<20x1xf32, #tpu.memory_space<vmem>>, %arg12: memref<20x20xf32, #tpu.memory_space<vmem>>, %arg13: memref<20x1xf32, #tpu.memory_space<vmem>>, %arg14: memref<1x20xf32, #tpu.memory_space<vmem>>, %arg15: memref<1x1xf32, #tpu.memory_space<vmem>>, %arg16: memref<1x256xf32, #tpu.memory_space<vmem>>) attributes {dimension_semantics = [#tpu.dimension_semantics<parallel>], iteration_bounds = array<i64: 4>, scalar_prefetch = 0 : i64, scratch_operands = 0 : i64, tpu.core_type = #tpu.core_type<tc>, window_params = [{transform_indices = @transform_0, window_bounds = array<i64: 256, 8>}, {transform_indices = @transform_1, window_bounds = array<i64: 256, 4>}, {pipeline_mode = #tpu.pipeline_mode<synchronous>, transform_indices = @transform_2, window_bounds = array<i64: 20, 8>}, {pipeline_mode = #tpu.pipeline_mode<synchronous>, transform_indices = @transform_3, window_bounds = array<i64: 20, 1>}, {pipeline_mode = #tpu.pipeline_mode<synchronous>, transform_indices = @transform_4, window_bounds = array<i64: 20, 4>}, {pipeline_mode = #tpu.pipeline_mode<synchronous>, transform_indices = @transform_5, window_bounds = array<i64: 20, 1>}, {pipeline_mode = #tpu.pipeline_mode<synchronous>, transform_indices = @transform_6, window_bounds = array<i64: 20, 20>}, {pipeline_mode = #tpu.pipeline_mode<synchronous>, transform_indices = @transform_7, window_bounds = array<i64: 20, 1>}, {pipeline_mode = #tpu.pipeline_mode<synchronous>, transform_indices = @transform_8, window_bounds = array<i64: 20, 20>}, {pipeline_mode = #tpu.pipeline_mode<synchronous>, transform_indices = @transform_9, window_bounds = array<i64: 20, 20>}, {pipeline_mode = #tpu.pipeline_mode<synchronous>, transform_indices = @transform_10, window_bounds = array<i64: 20, 1>}, {pipeline_mode = #tpu.pipeline_mode<synchronous>, transform_indices = @transform_11, window_bounds = array<i64: 20, 20>}, {pipeline_mode = #tpu.pipeline_mode<synchronous>, transform_indices = @transform_12, window_bounds = array<i64: 20, 1>}, {pipeline_mode = #tpu.pipeline_mode<synchronous>, transform_indices = @transform_13, window_bounds = array<i64: 1, 20>}, {pipeline_mode = #tpu.pipeline_mode<synchronous>, transform_indices = @transform_14, window_bounds = array<i64: 1, 1>}, {transform_indices = @transform_15, window_bounds = array<i64: 1, 256>}]} {
    %c0 = arith.constant 0 : index
    %c0_0 = arith.constant 0 : index
    %0 = vector.load %arg5[%c0, %c0_0] : memref<20x4xf32, #tpu.memory_space<vmem>>, vector<20x4xf32>
    %c0_1 = arith.constant 0 : index
    %c0_2 = arith.constant 0 : index
    %1 = vector.load %arg2[%c0_1, %c0_2] : memref<256x4xf32, #tpu.memory_space<vmem>>, vector<256x4xf32>
    %cst = arith.constant dense<0.000000e+00> : vector<20x256xf32>
    %2 = tpu.matmul %0, %1, %cst {dimension_numbers = #tpu.dot_dimension_numbers<[1], [1], [0], [0], [0, 0, 1, 0], [], []>} : vector<20x4xf32>, vector<256x4xf32>, vector<20x256xf32> -> vector<20x256xf32>
    %c0_3 = arith.constant 0 : index
    %c0_4 = arith.constant 0 : index
    %3 = vector.load %arg6[%c0_3, %c0_4] : memref<20x1xf32, #tpu.memory_space<vmem>>, vector<20x1xf32>
    %4 = vector.broadcast %3 : vector<20x1xf32> to vector<20x256xf32>
    %5 = arith.addf %2, %4 : vector<20x256xf32>
    %cst_5 = arith.constant 0.000000e+00 : f32
    %6 = vector.broadcast %cst_5 : f32 to vector<20x256xf32>
    %7 = arith.maximumf %5, %6 : vector<20x256xf32>
    %c0_6 = arith.constant 0 : index
    %c0_7 = arith.constant 0 : index
    %8 = vector.load %arg3[%c0_6, %c0_7] : memref<20x8xf32, #tpu.memory_space<vmem>>, vector<20x8xf32>
    %c0_8 = arith.constant 0 : index
    %c0_9 = arith.constant 0 : index
    %9 = vector.load %arg1[%c0_8, %c0_9] : memref<256x8xf32, #tpu.memory_space<vmem>>, vector<256x8xf32>
    %cst_10 = arith.constant dense<0.000000e+00> : vector<20x256xf32>
    %10 = tpu.matmul %8, %9, %cst_10 {dimension_numbers = #tpu.dot_dimension_numbers<[1], [1], [0], [0], [0, 0, 1, 0], [], []>} : vector<20x8xf32>, vector<256x8xf32>, vector<20x256xf32> -> vector<20x256xf32>
    %c0_11 = arith.constant 0 : index
    %c0_12 = arith.constant 0 : index
    %11 = vector.load %arg4[%c0_11, %c0_12] : memref<20x1xf32, #tpu.memory_space<vmem>>, vector<20x1xf32>
    %12 = vector.broadcast %11 : vector<20x1xf32> to vector<20x256xf32>
    %13 = arith.addf %10, %12 : vector<20x256xf32>
    %cst_13 = arith.constant 0.000000e+00 : f32
    %14 = vector.broadcast %cst_13 : f32 to vector<20x256xf32>
    %15 = arith.maximumf %13, %14 : vector<20x256xf32>
    %c0_14 = arith.constant 0 : index
    %c0_15 = arith.constant 0 : index
    %16 = vector.load %arg7[%c0_14, %c0_15] : memref<20x20xf32, #tpu.memory_space<vmem>>, vector<20x20xf32>
    %cst_16 = arith.constant dense<0.000000e+00> : vector<20x256xf32>
    %17 = tpu.matmul %16, %15, %cst_16 {dimension_numbers = #tpu.dot_dimension_numbers<[1], [0], [0], [1], [0, 0, 1, 1], [], []>} : vector<20x20xf32>, vector<20x256xf32>, vector<20x256xf32> -> vector<20x256xf32>
    %c0_17 = arith.constant 0 : index
    %c0_18 = arith.constant 0 : index
    %18 = vector.load %arg8[%c0_17, %c0_18] : memref<20x1xf32, #tpu.memory_space<vmem>>, vector<20x1xf32>
    %19 = vector.broadcast %18 : vector<20x1xf32> to vector<20x256xf32>
    %20 = arith.addf %17, %19 : vector<20x256xf32>
    %cst_19 = arith.constant 0.000000e+00 : f32
    %21 = vector.broadcast %cst_19 : f32 to vector<20x256xf32>
    %22 = arith.maximumf %20, %21 : vector<20x256xf32>
    %c0_20 = arith.constant 0 : index
    %c0_21 = arith.constant 0 : index
    %23 = vector.load %arg9[%c0_20, %c0_21] : memref<20x20xf32, #tpu.memory_space<vmem>>, vector<20x20xf32>
    %cst_22 = arith.constant dense<0.000000e+00> : vector<20x256xf32>
    %24 = tpu.matmul %23, %22, %cst_22 {dimension_numbers = #tpu.dot_dimension_numbers<[1], [0], [0], [1], [0, 0, 1, 1], [], []>} : vector<20x20xf32>, vector<20x256xf32>, vector<20x256xf32> -> vector<20x256xf32>
    %c0_23 = arith.constant 0 : index
    %c0_24 = arith.constant 0 : index
    %25 = vector.load %arg10[%c0_23, %c0_24] : memref<20x20xf32, #tpu.memory_space<vmem>>, vector<20x20xf32>
    %cst_25 = arith.constant dense<0.000000e+00> : vector<20x256xf32>
    %26 = tpu.matmul %25, %7, %cst_25 {dimension_numbers = #tpu.dot_dimension_numbers<[1], [0], [0], [1], [0, 0, 1, 1], [], []>} : vector<20x20xf32>, vector<20x256xf32>, vector<20x256xf32> -> vector<20x256xf32>
    %27 = arith.addf %24, %26 : vector<20x256xf32>
    %c0_26 = arith.constant 0 : index
    %c0_27 = arith.constant 0 : index
    %28 = vector.load %arg11[%c0_26, %c0_27] : memref<20x1xf32, #tpu.memory_space<vmem>>, vector<20x1xf32>
    %29 = vector.broadcast %28 : vector<20x1xf32> to vector<20x256xf32>
    %30 = arith.addf %27, %29 : vector<20x256xf32>
    %cst_28 = arith.constant 0.000000e+00 : f32
    %31 = vector.broadcast %cst_28 : f32 to vector<20x256xf32>
    %32 = arith.maximumf %30, %31 : vector<20x256xf32>
    %c0_29 = arith.constant 0 : index
    %c0_30 = arith.constant 0 : index
    %33 = vector.load %arg12[%c0_29, %c0_30] : memref<20x20xf32, #tpu.memory_space<vmem>>, vector<20x20xf32>
    %cst_31 = arith.constant dense<0.000000e+00> : vector<20x256xf32>
    %34 = tpu.matmul %33, %32, %cst_31 {dimension_numbers = #tpu.dot_dimension_numbers<[1], [0], [0], [1], [0, 0, 1, 1], [], []>} : vector<20x20xf32>, vector<20x256xf32>, vector<20x256xf32> -> vector<20x256xf32>
    %c0_32 = arith.constant 0 : index
    %c0_33 = arith.constant 0 : index
    %35 = vector.load %arg13[%c0_32, %c0_33] : memref<20x1xf32, #tpu.memory_space<vmem>>, vector<20x1xf32>
    %36 = vector.broadcast %35 : vector<20x1xf32> to vector<20x256xf32>
    %37 = arith.addf %34, %36 : vector<20x256xf32>
    %cst_34 = arith.constant 0.000000e+00 : f32
    %38 = vector.broadcast %cst_34 : f32 to vector<20x256xf32>
    %39 = arith.maximumf %37, %38 : vector<20x256xf32>
    %c0_35 = arith.constant 0 : index
    %c0_36 = arith.constant 0 : index
    %40 = vector.load %arg14[%c0_35, %c0_36] : memref<1x20xf32, #tpu.memory_space<vmem>>, vector<1x20xf32>
    %cst_37 = arith.constant dense<0.000000e+00> : vector<1x256xf32>
    %41 = tpu.matmul %40, %39, %cst_37 {dimension_numbers = #tpu.dot_dimension_numbers<[1], [0], [0], [1], [0, 0, 1, 1], [], []>} : vector<1x20xf32>, vector<20x256xf32>, vector<1x256xf32> -> vector<1x256xf32>
    %c0_38 = arith.constant 0 : index
    %c0_39 = arith.constant 0 : index
    %42 = vector.load %arg15[%c0_38, %c0_39] : memref<1x1xf32, #tpu.memory_space<vmem>>, vector<1x1xf32>
    %43 = vector.broadcast %42 : vector<1x1xf32> to vector<1x256xf32>
    %44 = arith.addf %41, %43 : vector<1x256xf32>
    %c0_40 = arith.constant 0 : index
    %c0_41 = arith.constant 0 : index
    %45 = vector.load %arg16[%c0_40, %c0_41] : memref<1x256xf32, #tpu.memory_space<vmem>>, vector<1x256xf32>
    tpu.vector_store %arg16[%c0_40, %c0_41], %44 {strides = array<i32>} : memref<1x256xf32, #tpu.memory_space<vmem>>, vector<1x256xf32>,
    return
  }
  func.func @transform_0(%arg0: i32) -> (i32, i32) {
    %c0_i32 = arith.constant 0 : i32
    %c0_i32_0 = arith.constant 0 : i32
    return %arg0, %c0_i32 : i32, i32
  }
  func.func @transform_1(%arg0: i32) -> (i32, i32) {
    %c0_i32 = arith.constant 0 : i32
    %c0_i32_0 = arith.constant 0 : i32
    return %arg0, %c0_i32 : i32, i32
  }
  func.func @transform_2(%arg0: i32) -> (i32, i32) {
    %c0_i32 = arith.constant 0 : i32
    %c0_i32_0 = arith.constant 0 : i32
    %c0_i32_1 = arith.constant 0 : i32
    return %c0_i32, %c0_i32_0 : i32, i32
  }
  func.func @transform_3(%arg0: i32) -> (i32, i32) {
    %c0_i32 = arith.constant 0 : i32
    %c0_i32_0 = arith.constant 0 : i32
    %c0_i32_1 = arith.constant 0 : i32
    return %c0_i32, %c0_i32_0 : i32, i32
  }
  func.func @transform_4(%arg0: i32) -> (i32, i32) {
    %c0_i32 = arith.constant 0 : i32
    %c0_i32_0 = arith.constant 0 : i32
    %c0_i32_1 = arith.constant 0 : i32
    return %c0_i32, %c0_i32_0 : i32, i32
  }
  func.func @transform_5(%arg0: i32) -> (i32, i32) {
    %c0_i32 = arith.constant 0 : i32
    %c0_i32_0 = arith.constant 0 : i32
    %c0_i32_1 = arith.constant 0 : i32
    return %c0_i32, %c0_i32_0 : i32, i32
  }
  func.func @transform_6(%arg0: i32) -> (i32, i32) {
    %c0_i32 = arith.constant 0 : i32
    %c0_i32_0 = arith.constant 0 : i32
    %c0_i32_1 = arith.constant 0 : i32
    return %c0_i32, %c0_i32_0 : i32, i32
  }
  func.func @transform_7(%arg0: i32) -> (i32, i32) {
    %c0_i32 = arith.constant 0 : i32
    %c0_i32_0 = arith.constant 0 : i32
    %c0_i32_1 = arith.constant 0 : i32
    return %c0_i32, %c0_i32_0 : i32, i32
  }
  func.func @transform_8(%arg0: i32) -> (i32, i32) {
    %c0_i32 = arith.constant 0 : i32
    %c0_i32_0 = arith.constant 0 : i32
    %c0_i32_1 = arith.constant 0 : i32
    return %c0_i32, %c0_i32_0 : i32, i32
  }
  func.func @transform_9(%arg0: i32) -> (i32, i32) {
    %c0_i32 = arith.constant 0 : i32
    %c0_i32_0 = arith.constant 0 : i32
    %c0_i32_1 = arith.constant 0 : i32
    return %c0_i32, %c0_i32_0 : i32, i32
  }
  func.func @transform_10(%arg0: i32) -> (i32, i32) {
    %c0_i32 = arith.constant 0 : i32
    %c0_i32_0 = arith.constant 0 : i32
    %c0_i32_1 = arith.constant 0 : i32
    return %c0_i32, %c0_i32_0 : i32, i32
  }
  func.func @transform_11(%arg0: i32) -> (i32, i32) {
    %c0_i32 = arith.constant 0 : i32
    %c0_i32_0 = arith.constant 0 : i32
    %c0_i32_1 = arith.constant 0 : i32
    return %c0_i32, %c0_i32_0 : i32, i32
  }
  func.func @transform_12(%arg0: i32) -> (i32, i32) {
    %c0_i32 = arith.constant 0 : i32
    %c0_i32_0 = arith.constant 0 : i32
    %c0_i32_1 = arith.constant 0 : i32
    return %c0_i32, %c0_i32_0 : i32, i32
  }
  func.func @transform_13(%arg0: i32) -> (i32, i32) {
    %c0_i32 = arith.constant 0 : i32
    %c0_i32_0 = arith.constant 0 : i32
    %c0_i32_1 = arith.constant 0 : i32
    return %c0_i32, %c0_i32_0 : i32, i32
  }
  func.func @transform_14(%arg0: i32) -> (i32, i32) {
    %c0_i32 = arith.constant 0 : i32
    %c0_i32_0 = arith.constant 0 : i32
    %c0_i32_1 = arith.constant 0 : i32
    return %c0_i32, %c0_i32_0 : i32, i32
  }
  func.func @transform_15(%arg0: i32) -> (i32, i32) {
    %c0_i32 = arith.constant 0 : i32
    %c0_i32_0 = arith.constant 0 : i32
    return %c0_i32, %arg0 : i32, i32
  }
}

</mosaic_0001>

<llo_original>
// kernel: critic_forward.1
$region0: #{critic_forward.1}
  #allocation0 [shape = 'u32[]', space=smem, size = 0x4, offset = 0x4, fixed_abs, tag = 'smem constant byte address 0x4 - core index']
  #allocation1 [shape = 'u32[72,128]{1,0:T(1,128)}', space=vmem, size = 0x9000, scoped, tag = 'internal scratch']
  #allocation2 [shape = 'f32[1,1]{1,0:T(1,128)S(1)}', space=vmem, size = 0x200, scoped, tag = 'scoped memory for critic_forward.1']
  %s0 = inlined_call_operand.vmem [shape: f32[1000,8], index: 0, kind: input, shape index: {}]
  %s1 = inlined_call_operand.vmem [shape: f32[1000,4], index: 1, kind: input, shape index: {}]
  %s2 = inlined_call_operand.vmem [shape: f32[20,8], index: 2, kind: input, shape index: {}]
  %s3 = inlined_call_operand.vmem [shape: f32[20,1], index: 3, kind: input, shape index: {}]
  %s4 = inlined_call_operand.vmem [shape: f32[20,4], index: 4, kind: input, shape index: {}]
  %s5 = inlined_call_operand.vmem [shape: f32[20,1], index: 5, kind: input, shape index: {}]
  %s6 = inlined_call_operand.vmem [shape: f32[20,20], index: 6, kind: input, shape index: {}]
  %s7 = inlined_call_operand.vmem [shape: f32[20,1], index: 7, kind: input, shape index: {}]
  %s8 = inlined_call_operand.vmem [shape: f32[20,20], index: 8, kind: input, shape index: {}]
  %s9 = inlined_call_operand.vmem [shape: f32[20,20], index: 9, kind: input, shape index: {}]
  %s10 = inlined_call_operand.vmem [shape: f32[20,1], index: 10, kind: input, shape index: {}]
  %s11 = inlined_call_operand.vmem [shape: f32[20,20], index: 11, kind: input, shape index: {}]
  %s12 = inlined_call_operand.vmem [shape: f32[20,1], index: 12, kind: input, shape index: {}]
  %s13 = inlined_call_operand.vmem [shape: f32[1,20], index: 13, kind: input, shape index: {}]
  %s14 = inlined_call_operand.<no memory space> [shape: f32[1,1], index: 14, kind: input, shape index: {}]
  %s15 = inlined_call_operand.vmem [shape: f32[1,1024], index: 15, kind: output, shape index: {}]
  %s16 = sld [smem:[#allocation0]]
  $region93: #{critic_forward.1} parent=0
    _
  %s18 = ssub.s32 1, %s16
  %s19 = scalar_select 0, %s18, %s16
  %v20 = vstv %s14
  %21 = vst [vmem:[#allocation2] sm:$0x1] %v20
  loop: start=0, step=1, limit=6
  $region2: #{critic_forward.1} parent=0 // loop_pre_header
    _
  $region3: #{critic_forward.1} parent=0 // loop_header
    %s23 = sphi 0, %s27
    %p24 = scmp.ge.s32.totalorder %s23, 6
    %s33 = sphi 0, %s35
    %s36 = sphi 0, %s33
    %s37 = sphi 0, %s36
    %s53 = sphi 0, %s37
    %s59 = sphi 0, %s61
    %s62 = sphi 0, %s59
    %s63 = sphi 0, %s62
    %s79 = sphi 0, %s63
    %s83 = sphi 0, %s83
    %s85 = sphi 0, %s83
    %s86 = sphi 0, %s85
    %s100 = sphi 0, %s86
    %s104 = sphi 0, %s104
    %s106 = sphi 0, %s104
    %s107 = sphi 0, %s106
    %s121 = sphi 0, %s107
    %s125 = sphi 0, %s125
    %s127 = sphi 0, %s125
    %s128 = sphi 0, %s127
    %s142 = sphi 0, %s128
    %s146 = sphi 0, %s146
    %s148 = sphi 0, %s146
    %s149 = sphi 0, %s148
    %s163 = sphi 0, %s149
    %s167 = sphi 0, %s167
    %s169 = sphi 0, %s167
    %s170 = sphi 0, %s169
    %s184 = sphi 0, %s170
    %s188 = sphi 0, %s188
    %s190 = sphi 0, %s188
    %s191 = sphi 0, %s190
    %s205 = sphi 0, %s191
    %s209 = sphi 0, %s209
    %s211 = sphi 0, %s209
    %s212 = sphi 0, %s211
    %s226 = sphi 0, %s212
    %s230 = sphi 0, %s230
    %s232 = sphi 0, %s230
    %s233 = sphi 0, %s232
    %s247 = sphi 0, %s233
    %s251 = sphi 0, %s251
    %s253 = sphi 0, %s251
    %s254 = sphi 0, %s253
    %s268 = sphi 0, %s254
    %s272 = sphi 0, %s272
    %s274 = sphi 0, %s272
    %s275 = sphi 0, %s274
    %s289 = sphi 0, %s275
    %s293 = sphi 0, %s293
    %s295 = sphi 0, %s293
    %s296 = sphi 0, %s295
    %s310 = sphi 0, %s296
    %s314 = sphi 0, %s314
    %s316 = sphi 0, %s314
    %s317 = sphi 0, %s316
    %s331 = sphi 0, %s317
    %s335 = sphi 0, %s335
    %s337 = sphi 0, %s335
    %s338 = sphi 0, %s337
    %s352 = sphi 0, %s338
    %s358 = sphi 0, %s360
    %s361 = sphi 0, %s358
    %s362 = sphi 0, %s361
    %s378 = sphi 0, %s362
  $region4: #{critic_forward.1} parent=0 // loop_header_branch
    %26 = sbr.rel (%p24) target = $region8
  $region5: #{critic_forward.1} parent=0 // loop_body
    %s28 = ssub.s32 %s23, 1
    %s29 = ssub.s32 %s23, 2
    %s30 = sadd.s32 %s23, 1
    %s31 = ssub.s32 %s23, %s30
    %p32 = scmp.eq.s32.totalorder %s31, 0
    %s34 = sadd.s32 %s33, 1
    %s35 = scalar_select %p32, %s33, %s34
    %p38 = pneg %p32
    %p39 = scmp.eq.s32.totalorder %s23, 3
    %p40 = por %p38, %p39
    %p41 = scmp.ne.s32.totalorder %s33, %s36
    %p42 = scmp.eq.s32.totalorder %s23, 0
    %p43 = por %p41, %p42
    %p44 = scmp.ne.s32.totalorder %s33, %s36
    %p45 = scmp.eq.s32.totalorder %s28, 3
    %p46 = por %p44, %p45
    %p47 = scmp.ne.s32.totalorder %s36, %s37
    %p48 = scmp.eq.s32.totalorder %s28, 0
    %p49 = por %p47, %p48
    %p50 = scmp.ne.s32.totalorder %s36, %s37
    %p51 = scmp.eq.s32.totalorder %s29, 3
    %p52 = por %p50, %p51
    %p54 = scmp.ne.s32.totalorder %s37, %s53
    %p55 = scmp.eq.s32.totalorder %s29, 0
    %p56 = por %p54, %p55
    %s57 = ssub.s32 %s23, %s30
    %p58 = scmp.eq.s32.totalorder %s57, 0
    %s60 = sadd.s32 %s59, 1
    %s61 = scalar_select %p58, %s59, %s60
    %p64 = pneg %p58
    %p65 = scmp.eq.s32.totalorder %s23, 3
    %p66 = por %p64, %p65
    %p67 = scmp.ne.s32.totalorder %s59, %s62
    %p68 = scmp.eq.s32.totalorder %s23, 0
    %p69 = por %p67, %p68
    %p70 = scmp.ne.s32.totalorder %s59, %s62
    %p71 = scmp.eq.s32.totalorder %s28, 3
    %p72 = por %p70, %p71
    %p73 = scmp.ne.s32.totalorder %s62, %s63
    %p74 = scmp.eq.s32.totalorder %s28, 0
    %p75 = por %p73, %p74
    %p76 = scmp.ne.s32.totalorder %s62, %s63
    %p77 = scmp.eq.s32.totalorder %s29, 3
    %p78 = por %p76, %p77
    %p80 = scmp.ne.s32.totalorder %s63, %s79
    %p81 = scmp.eq.s32.totalorder %s29, 0
    %p82 = por %p80, %p81
    %s84 = sadd.s32 %s83, 1
    %p87 = scmp.eq.s32.totalorder %s23, 3
    %p88 = scmp.ne.s32.totalorder %s83, %s85
    %p89 = scmp.eq.s32.totalorder %s23, 0
    %p90 = por %p88, %p89
    %p91 = scmp.ne.s32.totalorder %s83, %s85
    %p92 = scmp.eq.s32.totalorder %s28, 3
    %p93 = por %p91, %p92
    %p94 = scmp.ne.s32.totalorder %s85, %s86
    %p95 = scmp.eq.s32.totalorder %s28, 0
    %p96 = por %p94, %p95
    %p97 = scmp.ne.s32.totalorder %s85, %s86
    %p98 = scmp.eq.s32.totalorder %s29, 3
    %p99 = por %p97, %p98
    %p101 = scmp.ne.s32.totalorder %s86, %s100
    %p102 = scmp.eq.s32.totalorder %s29, 0
    %p103 = por %p101, %p102
    %s105 = sadd.s32 %s104, 1
    %p108 = scmp.eq.s32.totalorder %s23, 3
    %p109 = scmp.ne.s32.totalorder %s104, %s106
    %p110 = scmp.eq.s32.totalorder %s23, 0
    %p111 = por %p109, %p110
    %p112 = scmp.ne.s32.totalorder %s104, %s106
    %p113 = scmp.eq.s32.totalorder %s28, 3
    %p114 = por %p112, %p113
    %p115 = scmp.ne.s32.totalorder %s106, %s107
    %p116 = scmp.eq.s32.totalorder %s28, 0
    %p117 = por %p115, %p116
    %p118 = scmp.ne.s32.totalorder %s106, %s107
    %p119 = scmp.eq.s32.totalorder %s29, 3
    %p120 = por %p118, %p119
    %p122 = scmp.ne.s32.totalorder %s107, %s121
    %p123 = scmp.eq.s32.totalorder %s29, 0
    %p124 = por %p122, %p123
    %s126 = sadd.s32 %s125, 1
    %p129 = scmp.eq.s32.totalorder %s23, 3
    %p130 = scmp.ne.s32.totalorder %s125, %s127
    %p131 = scmp.eq.s32.totalorder %s23, 0
    %p132 = por %p130, %p131
    %p133 = scmp.ne.s32.totalorder %s125, %s127
    %p134 = scmp.eq.s32.totalorder %s28, 3
    %p135 = por %p133, %p134
    %p136 = scmp.ne.s32.totalorder %s127, %s128
    %p137 = scmp.eq.s32.totalorder %s28, 0
    %p138 = por %p136, %p137
    %p139 = scmp.ne.s32.totalorder %s127, %s128
    %p140 = scmp.eq.s32.totalorder %s29, 3
    %p141 = por %p139, %p140
    %p143 = scmp.ne.s32.totalorder %s128, %s142
    %p144 = scmp.eq.s32.totalorder %s29, 0
    %p145 = por %p143, %p144
    %s147 = sadd.s32 %s146, 1
    %p150 = scmp.eq.s32.totalorder %s23, 3
    %p151 = scmp.ne.s32.totalorder %s146, %s148
    %p152 = scmp.eq.s32.totalorder %s23, 0
    %p153 = por %p151, %p152
    %p154 = scmp.ne.s32.totalorder %s146, %s148
    %p155 = scmp.eq.s32.totalorder %s28, 3
    %p156 = por %p154, %p155
    %p157 = scmp.ne.s32.totalorder %s148, %s149
    %p158 = scmp.eq.s32.totalorder %s28, 0
    %p159 = por %p157, %p158
    %p160 = scmp.ne.s32.totalorder %s148, %s149
    %p161 = scmp.eq.s32.totalorder %s29, 3
    %p162 = por %p160, %p161
    %p164 = scmp.ne.s32.totalorder %s149, %s163
    %p165 = scmp.eq.s32.totalorder %s29, 0
    %p166 = por %p164, %p165
    %s168 = sadd.s32 %s167, 1
    %p171 = scmp.eq.s32.totalorder %s23, 3
    %p172 = scmp.ne.s32.totalorder %s167, %s169
    %p173 = scmp.eq.s32.totalorder %s23, 0
    %p174 = por %p172, %p173
    %p175 = scmp.ne.s32.totalorder %s167, %s169
    %p176 = scmp.eq.s32.totalorder %s28, 3
    %p177 = por %p175, %p176
    %p178 = scmp.ne.s32.totalorder %s169, %s170
    %p179 = scmp.eq.s32.totalorder %s28, 0
    %p180 = por %p178, %p179
    %p181 = scmp.ne.s32.totalorder %s169, %s170
    %p182 = scmp.eq.s32.totalorder %s29, 3
    %p183 = por %p181, %p182
    %p185 = scmp.ne.s32.totalorder %s170, %s184
    %p186 = scmp.eq.s32.totalorder %s29, 0
    %p187 = por %p185, %p186
    %s189 = sadd.s32 %s188, 1
    %p192 = scmp.eq.s32.totalorder %s23, 3
    %p193 = scmp.ne.s32.totalorder %s188, %s190
    %p194 = scmp.eq.s32.totalorder %s23, 0
    %p195 = por %p193, %p194
    %p196 = scmp.ne.s32.totalorder %s188, %s190
    %p197 = scmp.eq.s32.totalorder %s28, 3
    %p198 = por %p196, %p197
    %p199 = scmp.ne.s32.totalorder %s190, %s191
    %p200 = scmp.eq.s32.totalorder %s28, 0
    %p201 = por %p199, %p200
    %p202 = scmp.ne.s32.totalorder %s190, %s191
    %p203 = scmp.eq.s32.totalorder %s29, 3
    %p204 = por %p202, %p203
    %p206 = scmp.ne.s32.totalorder %s191, %s205
    %p207 = scmp.eq.s32.totalorder %s29, 0
    %p208 = por %p206, %p207
    %s210 = sadd.s32 %s209, 1
    %p213 = scmp.eq.s32.totalorder %s23, 3
    %p214 = scmp.ne.s32.totalorder %s209, %s211
    %p215 = scmp.eq.s32.totalorder %s23, 0
    %p216 = por %p214, %p215
    %p217 = scmp.ne.s32.totalorder %s209, %s211
    %p218 = scmp.eq.s32.totalorder %s28, 3
    %p219 = por %p217, %p218
    %p220 = scmp.ne.s32.totalorder %s211, %s212
    %p221 = scmp.eq.s32.totalorder %s28, 0
    %p222 = por %p220, %p221
    %p223 = scmp.ne.s32.totalorder %s211, %s212
    %p224 = scmp.eq.s32.totalorder %s29, 3
    %p225 = por %p223, %p224
    %p227 = scmp.ne.s32.totalorder %s212, %s226
    %p228 = scmp.eq.s32.totalorder %s29, 0
    %p229 = por %p227, %p228
    %s231 = sadd.s32 %s230, 1
    %p234 = scmp.eq.s32.totalorder %s23, 3
    %p235 = scmp.ne.s32.totalorder %s230, %s232
    %p236 = scmp.eq.s32.totalorder %s23, 0
    %p237 = por %p235, %p236
    %p238 = scmp.ne.s32.totalorder %s230, %s232
    %p239 = scmp.eq.s32.totalorder %s28, 3
    %p240 = por %p238, %p239
    %p241 = scmp.ne.s32.totalorder %s232, %s233
    %p242 = scmp.eq.s32.totalorder %s28, 0
    %p243 = por %p241, %p242
    %p244 = scmp.ne.s32.totalorder %s232, %s233
    %p245 = scmp.eq.s32.totalorder %s29, 3
    %p246 = por %p244, %p245
    %p248 = scmp.ne.s32.totalorder %s233, %s247
    %p249 = scmp.eq.s32.totalorder %s29, 0
    %p250 = por %p248, %p249
    %s252 = sadd.s32 %s251, 1
    %p255 = scmp.eq.s32.totalorder %s23, 3
    %p256 = scmp.ne.s32.totalorder %s251, %s253
    %p257 = scmp.eq.s32.totalorder %s23, 0
    %p258 = por %p256, %p257
    %p259 = scmp.ne.s32.totalorder %s251, %s253
    %p260 = scmp.eq.s32.totalorder %s28, 3
    %p261 = por %p259, %p260
    %p262 = scmp.ne.s32.totalorder %s253, %s254
    %p263 = scmp.eq.s32.totalorder %s28, 0
    %p264 = por %p262, %p263
    %p265 = scmp.ne.s32.totalorder %s253, %s254
    %p266 = scmp.eq.s32.totalorder %s29, 3
    %p267 = por %p265, %p266
    %p269 = scmp.ne.s32.totalorder %s254, %s268
    %p270 = scmp.eq.s32.totalorder %s29, 0
    %p271 = por %p269, %p270
    %s273 = sadd.s32 %s272, 1
    %p276 = scmp.eq.s32.totalorder %s23, 3
    %p277 = scmp.ne.s32.totalorder %s272, %s274
    %p278 = scmp.eq.s32.totalorder %s23, 0
    %p279 = por %p277, %p278
    %p280 = scmp.ne.s32.totalorder %s272, %s274
    %p281 = scmp.eq.s32.totalorder %s28, 3
    %p282 = por %p280, %p281
    %p283 = scmp.ne.s32.totalorder %s274, %s275
    %p284 = scmp.eq.s32.totalorder %s28, 0
    %p285 = por %p283, %p284
    %p286 = scmp.ne.s32.totalorder %s274, %s275
    %p287 = scmp.eq.s32.totalorder %s29, 3
    %p288 = por %p286, %p287
    %p290 = scmp.ne.s32.totalorder %s275, %s289
    %p291 = scmp.eq.s32.totalorder %s29, 0
    %p292 = por %p290, %p291
    %s294 = sadd.s32 %s293, 1
    %p297 = scmp.eq.s32.totalorder %s23, 3
    %p298 = scmp.ne.s32.totalorder %s293, %s295
    %p299 = scmp.eq.s32.totalorder %s23, 0
    %p300 = por %p298, %p299
    %p301 = scmp.ne.s32.totalorder %s293, %s295
    %p302 = scmp.eq.s32.totalorder %s28, 3
    %p303 = por %p301, %p302
    %p304 = scmp.ne.s32.totalorder %s295, %s296
    %p305 = scmp.eq.s32.totalorder %s28, 0
    %p306 = por %p304, %p305
    %p307 = scmp.ne.s32.totalorder %s295, %s296
    %p308 = scmp.eq.s32.totalorder %s29, 3
    %p309 = por %p307, %p308
    %p311 = scmp.ne.s32.totalorder %s296, %s310
    %p312 = scmp.eq.s32.totalorder %s29, 0
    %p313 = por %p311, %p312
    %s315 = sadd.s32 %s314, 1
    %p318 = scmp.eq.s32.totalorder %s23, 3
    %p319 = scmp.ne.s32.totalorder %s314, %s316
    %p320 = scmp.eq.s32.totalorder %s23, 0
    %p321 = por %p319, %p320
    %p322 = scmp.ne.s32.totalorder %s314, %s316
    %p323 = scmp.eq.s32.totalorder %s28, 3
    %p324 = por %p322, %p323
    %p325 = scmp.ne.s32.totalorder %s316, %s317
    %p326 = scmp.eq.s32.totalorder %s28, 0
    %p327 = por %p325, %p326
    %p328 = scmp.ne.s32.totalorder %s316, %s317
    %p329 = scmp.eq.s32.totalorder %s29, 3
    %p330 = por %p328, %p329
    %p332 = scmp.ne.s32.totalorder %s317, %s331
    %p333 = scmp.eq.s32.totalorder %s29, 0
    %p334 = por %p332, %p333
    %s336 = sadd.s32 %s335, 1
    %p339 = scmp.eq.s32.totalorder %s23, 3
    %p340 = scmp.ne.s32.totalorder %s335, %s337
    %p341 = scmp.eq.s32.totalorder %s23, 0
    %p342 = por %p340, %p341
    %p343 = scmp.ne.s32.totalorder %s335, %s337
    %p344 = scmp.eq.s32.totalorder %s28, 3
    %p345 = por %p343, %p344
    %p346 = scmp.ne.s32.totalorder %s337, %s338
    %p347 = scmp.eq.s32.totalorder %s28, 0
    %p348 = por %p346, %p347
    %p349 = scmp.ne.s32.totalorder %s337, %s338
    %p350 = scmp.eq.s32.totalorder %s29, 3
    %p351 = por %p349, %p350
    %p353 = scmp.ne.s32.totalorder %s338, %s352
    %p354 = scmp.eq.s32.totalorder %s29, 0
    %p355 = por %p353, %p354
    %s356 = ssub.s32 %s23, %s30
    %p357 = scmp.eq.s32.totalorder %s356, 0
    %s359 = sadd.s32 %s358, 1
    %s360 = scalar_select %p357, %s358, %s359
    %p363 = pneg %p357
    %p364 = scmp.eq.s32.totalorder %s23, 3
    %p365 = por %p363, %p364
    %p366 = scmp.ne.s32.totalorder %s358, %s361
    %p367 = scmp.eq.s32.totalorder %s23, 0
    %p368 = por %p366, %p367
    %p369 = scmp.ne.s32.totalorder %s358, %s361
    %p370 = scmp.eq.s32.totalorder %s28, 3
    %p371 = por %p369, %p370
    %p372 = scmp.ne.s32.totalorder %s361, %s362
    %p373 = scmp.eq.s32.totalorder %s28, 0
    %p374 = por %p372, %p373
    %p375 = scmp.ne.s32.totalorder %s361, %s362
    %p376 = scmp.eq.s32.totalorder %s29, 3
    %p377 = por %p375, %p376
    %p379 = scmp.ne.s32.totalorder %s362, %s378
    %p380 = scmp.eq.s32.totalorder %s29, 0
    %p381 = por %p379, %p380
    %p382 = scmp.le.s32.totalorder 1, %s23
    %p383 = scmp.lt.s32.totalorder %s23, 5
    %p384 = pnand %p382, %p383
    %p385 = pneg %p384
    // Predicated region
    $region9: #{critic_forward.1} parent=5 // pred_check
      _
    $region10: #{critic_forward.1} parent=5 // pred_check_branch
      %387 = sbr.rel (%p384) target = $region12
    $region11: #{critic_forward.1} parent=5 // pred_region
      %s388 = ssub.s32 %s23, 1
      // Predicated region
      $region13: #{critic_forward.1} parent=11 // pred_check
        %p389 = pneg %p96
      $region14: #{critic_forward.1} parent=11 // pred_check_branch
        %391 = sbr.rel (%p389) target = $region16
      $region15: #{critic_forward.1} parent=11 // pred_region
        _
      $region16: #{critic_forward.1} parent=11 // pred_fallthru
        _
      // Predicated region
      $region17: #{critic_forward.1} parent=11 // pred_check
        %p392 = pneg %p117
      $region18: #{critic_forward.1} parent=11 // pred_check_branch
        %394 = sbr.rel (%p392) target = $region20
      $region19: #{critic_forward.1} parent=11 // pred_region
        _
      $region20: #{critic_forward.1} parent=11 // pred_fallthru
        _
      // Predicated region
      $region21: #{critic_forward.1} parent=11 // pred_check
        %p395 = pneg %p138
      $region22: #{critic_forward.1} parent=11 // pred_check_branch
        %397 = sbr.rel (%p395) target = $region24
      $region23: #{critic_forward.1} parent=11 // pred_region
        _
      $region24: #{critic_forward.1} parent=11 // pred_fallthru
        _
      // Predicated region
      $region25: #{critic_forward.1} parent=11 // pred_check
        %p398 = pneg %p159
      $region26: #{critic_forward.1} parent=11 // pred_check_branch
        %400 = sbr.rel (%p398) target = $region28
      $region27: #{critic_forward.1} parent=11 // pred_region
        _
      $region28: #{critic_forward.1} parent=11 // pred_fallthru
        _
      // Predicated region
      $region29: #{critic_forward.1} parent=11 // pred_check
        %p401 = pneg %p180
      $region30: #{critic_forward.1} parent=11 // pred_check_branch
        %403 = sbr.rel (%p401) target = $region32
      $region31: #{critic_forward.1} parent=11 // pred_region
        _
      $region32: #{critic_forward.1} parent=11 // pred_fallthru
        _
      // Predicated region
      $region33: #{critic_forward.1} parent=11 // pred_check
        %p404 = pneg %p201
      $region34: #{critic_forward.1} parent=11 // pred_check_branch
        %406 = sbr.rel (%p404) target = $region36
      $region35: #{critic_forward.1} parent=11 // pred_region
        _
      $region36: #{critic_forward.1} parent=11 // pred_fallthru
        _
      // Predicated region
      $region37: #{critic_forward.1} parent=11 // pred_check
        %p407 = pneg %p222
      $region38: #{critic_forward.1} parent=11 // pred_check_branch
        %409 = sbr.rel (%p407) target = $region40
      $region39: #{critic_forward.1} parent=11 // pred_region
        _
      $region40: #{critic_forward.1} parent=11 // pred_fallthru
        _
      // Predicated region
      $region41: #{critic_forward.1} parent=11 // pred_check
        %p410 = pneg %p243
      $region42: #{critic_forward.1} parent=11 // pred_check_branch
        %412 = sbr.rel (%p410) target = $region44
      $region43: #{critic_forward.1} parent=11 // pred_region
        _
      $region44: #{critic_forward.1} parent=11 // pred_fallthru
        _
      // Predicated region
      $region45: #{critic_forward.1} parent=11 // pred_check
        %p413 = pneg %p264
      $region46: #{critic_forward.1} parent=11 // pred_check_branch
        %415 = sbr.rel (%p413) target = $region48
      $region47: #{critic_forward.1} parent=11 // pred_region
        _
      $region48: #{critic_forward.1} parent=11 // pred_fallthru
        _
      // Predicated region
      $region49: #{critic_forward.1} parent=11 // pred_check
        %p416 = pneg %p285
      $region50: #{critic_forward.1} parent=11 // pred_check_branch
        %418 = sbr.rel (%p416) target = $region52
      $region51: #{critic_forward.1} parent=11 // pred_region
        _
      $region52: #{critic_forward.1} parent=11 // pred_fallthru
        _
      // Predicated region
      $region53: #{critic_forward.1} parent=11 // pred_check
        %p419 = pneg %p306
      $region54: #{critic_forward.1} parent=11 // pred_check_branch
        %421 = sbr.rel (%p419) target = $region56
      $region55: #{critic_forward.1} parent=11 // pred_region
        _
      $region56: #{critic_forward.1} parent=11 // pred_fallthru
        _
      // Predicated region
      $region57: #{critic_forward.1} parent=11 // pred_check
        %p422 = pneg %p327
      $region58: #{critic_forward.1} parent=11 // pred_check_branch
        %424 = sbr.rel (%p422) target = $region60
      $region59: #{critic_forward.1} parent=11 // pred_region
        _
      $region60: #{critic_forward.1} parent=11 // pred_fallthru
        _
      // Predicated region
      $region61: #{critic_forward.1} parent=11 // pred_check
        %p425 = pneg %p348
      $region62: #{critic_forward.1} parent=11 // pred_check_branch
        %427 = sbr.rel (%p425) target = $region64
      $region63: #{critic_forward.1} parent=11 // pred_region
        _
      $region64: #{critic_forward.1} parent=11 // pred_fallthru
        _
    $region12: #{critic_forward.1} parent=5 // pred_fallthru
      _
    %p428 = scmp.lt.s32.totalorder %s23, 4
    // Predicated region
    $region65: #{critic_forward.1} parent=5 // pred_check
      %p429 = pneg %p428
    $region66: #{critic_forward.1} parent=5 // pred_check_branch
      %431 = sbr.rel (%p429) target = $region68
    $region67: #{critic_forward.1} parent=5 // pred_region
      // Predicated region
      $region69: #{critic_forward.1} parent=67 // pred_check
        %p432 = pneg %p43
      $region70: #{critic_forward.1} parent=67 // pred_check_branch
        %434 = sbr.rel (%p432) target = $region72
      $region71: #{critic_forward.1} parent=67 // pred_region
        %s435 = smul.u32 32, %s23
        %s436 = ssub.s32 125, %s435
        %p437 = scmp.lt.s32.totalorder %s436, 32
        %s438 = scalar_select %p437, %s436, 32
        %s439 = smul.u32 8, %s438
        %p440 = scmp.lt.s32.totalorder %s435, 124
        %s441 = scalar_select %p440, %s435, 124
        %s442 = smul.addr %s441, 8
        %s443 = scalar_lea.vmem %s0, %s442
        %s444 = smul.u32 32, %s23
        %s445 = ssub.s32 125, %s444
        %p446 = scmp.lt.s32.totalorder %s445, 32
        %s447 = scalar_select %p446, %s445, 32
        %s448 = smul.u32 8, %s447
      $region72: #{critic_forward.1} parent=67 // pred_fallthru
        _
      // Predicated region
      $region73: #{critic_forward.1} parent=67 // pred_check
        %p449 = pneg %p69
      $region74: #{critic_forward.1} parent=67 // pred_check_branch
        %451 = sbr.rel (%p449) target = $region76
      $region75: #{critic_forward.1} parent=67 // pred_region
        %s452 = smul.u32 32, %s23
        %s453 = ssub.s32 125, %s452
        %p454 = scmp.lt.s32.totalorder %s453, 32
        %s455 = scalar_select %p454, %s453, 32
        %s456 = smul.u32 8, %s455
        %p457 = scmp.lt.s32.totalorder %s452, 124
        %s458 = scalar_select %p457, %s452, 124
        %s459 = smul.addr %s458, 8
        %s460 = scalar_lea.vmem %s1, %s459
        %s461 = smul.u32 32, %s23
        %s462 = ssub.s32 125, %s461
        %p463 = scmp.lt.s32.totalorder %s462, 32
        %s464 = scalar_select %p463, %s462, 32
        %s465 = smul.u32 8, %s464
      $region76: #{critic_forward.1} parent=67 // pred_fallthru
        _
    $region68: #{critic_forward.1} parent=5 // pred_fallthru
      _
    %p466 = scmp.le.s32.totalorder 1, %s23
    %p467 = scmp.lt.s32.totalorder %s23, 5
    %p468 = pnand %p466, %p467
    %p469 = pneg %p468
    // Predicated region
    $region77: #{critic_forward.1} parent=5 // pred_check
      _
    $region78: #{critic_forward.1} parent=5 // pred_check_branch
      %471 = sbr.rel (%p468) target = $region80
    $region79: #{critic_forward.1} parent=5 // pred_region
      %s472 = ssub.s32 %s23, 1
      %s473 = smul.u32 32, %s28
      %s474 = ssub.s32 125, %s473
      %p475 = scmp.lt.s32.totalorder %s474, 32
      %s476 = scalar_select %p475, %s474, 32
      %s477 = smul.u32 8, %s476
      %p478 = scmp.lt.s32.totalorder %s473, 124
      %s479 = scalar_select %p478, %s473, 124
      %s480 = smul.addr %s479, 8
      %s481 = scalar_lea.vmem %s0, %s480
      %p482 = pneg %p49
      %p483 = pneg %p46
      %s484 = smul.u32 32, %s28
      %s485 = ssub.s32 125, %s484
      %p486 = scmp.lt.s32.totalorder %s485, 32
      %s487 = scalar_select %p486, %s485, 32
      %s488 = smul.u32 8, %s487
      %p489 = scmp.lt.s32.totalorder %s484, 124
      %s490 = scalar_select %p489, %s484, 124
      %s491 = smul.addr %s490, 8
      %s492 = scalar_lea.vmem %s1, %s491
      %p493 = pneg %p75
      %p494 = pneg %p72
      %p495 = pneg %p96
      %p496 = pneg %p93
      %p497 = pneg %p117
      %p498 = pneg %p114
      %p499 = pneg %p138
      %p500 = pneg %p135
      %p501 = pneg %p159
      %p502 = pneg %p156
      %p503 = pneg %p180
      %p504 = pneg %p177
      %p505 = pneg %p201
      %p506 = pneg %p198
      %p507 = pneg %p222
      %p508 = pneg %p219
      %p509 = pneg %p243
      %p510 = pneg %p240
      %p511 = pneg %p264
      %p512 = pneg %p261
      %p513 = pneg %p285
      %p514 = pneg %p282
      %p515 = pneg %p306
      %p516 = pneg %p303
      %p517 = pneg %p327
      %p518 = pneg %p324
      %p519 = pneg %p348
      %p520 = pneg %p345
      %p521 = pneg %p374
      %p522 = pneg %p371
      %s523 = smul.u32 2, %s28
      %p524 = scmp.lt.s32.totalorder %s523, 7
      %s525 = scalar_select %p524, %s523, 7
      %s526 = scalar_lea.vmem %s15, %s525
      %s527 = smul.u32 32, %s28
      %s528 = ssub.s32 125, %s527
      %p529 = scmp.lt.s32.totalorder %s528, 32
      %s530 = scalar_select %p529, %s528, 32
      %s531 = smul.u32 8, %s530
      %p532 = scmp.lt.s32.totalorder %s527, 124
      %s533 = scalar_select %p532, %s527, 124
      %s534 = smul.addr %s533, 8
      %s535 = scalar_lea.vmem %s0, %s534
      %s536 = smul.u32 32, %s28
      %s537 = ssub.s32 125, %s536
      %p538 = scmp.lt.s32.totalorder %s537, 32
      %s539 = scalar_select %p538, %s537, 32
      %s540 = smul.u32 8, %s539
      %s541 = smul.u32 32, %s28
      %s542 = ssub.s32 125, %s541
      %p543 = scmp.lt.s32.totalorder %s542, 32
      %s544 = scalar_select %p543, %s542, 32
      %s545 = smul.u32 8, %s544
      %p546 = scmp.lt.s32.totalorder %s541, 124
      %s547 = scalar_select %p546, %s541, 124
      %s548 = smul.addr %s547, 8
      %s549 = scalar_lea.vmem %s1, %s548
      %s550 = smul.u32 32, %s28
      %s551 = ssub.s32 125, %s550
      %p552 = scmp.lt.s32.totalorder %s551, 32
      %s553 = scalar_select %p552, %s551, 32
      %s554 = smul.u32 8, %s553
      %s555 = smul.u32 2, %s28
      %p556 = scmp.lt.s32.totalorder %s555, 7
      %s557 = scalar_select %p556, %s555, 7
      %s558 = scalar_lea.vmem %s15, %s557
      %s559 = smul.u32 2, %s28
      %v560 = vld [vmem:[%s4] sm:$0xff]
      %v561 = vld [vmem:[%s4 + $0x8] sm:$0xff]
      %v562 = vld [vmem:[%s4 + $0x10] sm:$0xf]
      %v563 = vld [vmem:[%s549] sm:$0xff]
      %v564 = vld [vmem:[%s549 + $0x8] sm:$0xff]
      %v565 = vld [vmem:[%s549 + $0x10] sm:$0xff]
      %v566 = vld [vmem:[%s549 + $0x18] sm:$0xff]
      %v567 = vld [vmem:[%s549 + $0x20] sm:$0xff]
      %v568 = vld [vmem:[%s549 + $0x28] sm:$0xff]
      %v569 = vld [vmem:[%s549 + $0x30] sm:$0xff]
      %v570 = vld [vmem:[%s549 + $0x38] sm:$0xff]
      %v571 = vld [vmem:[%s549 + $0x40] sm:$0xff]
      %v572 = vld [vmem:[%s549 + $0x48] sm:$0xff]
      %v573 = vld [vmem:[%s549 + $0x50] sm:$0xff]
      %v574 = vld [vmem:[%s549 + $0x58] sm:$0xff]
      %v575 = vld [vmem:[%s549 + $0x60] sm:$0xff]
      %v576 = vld [vmem:[%s549 + $0x68] sm:$0xff]
      %v577 = vld [vmem:[%s549 + $0x70] sm:$0xff]
      %v578 = vld [vmem:[%s549 + $0x78] sm:$0xff]
      %v579 = vld [vmem:[%s549 + $0x80] sm:$0xff]
      %v580 = vld [vmem:[%s549 + $0x88] sm:$0xff]
      %v581 = vld [vmem:[%s549 + $0x90] sm:$0xff]
      %v582 = vld [vmem:[%s549 + $0x98] sm:$0xff]
      %v583 = vld [vmem:[%s549 + $0xa0] sm:$0xff]
      %v584 = vld [vmem:[%s549 + $0xa8] sm:$0xff]
      %v585 = vld [vmem:[%s549 + $0xb0] sm:$0xff]
      %v586 = vld [vmem:[%s549 + $0xb8] sm:$0xff]
      %v587 = vld [vmem:[%s549 + $0xc0] sm:$0xff]
      %v588 = vld [vmem:[%s549 + $0xc8] sm:$0xff]
      %v589 = vld [vmem:[%s549 + $0xd0] sm:$0xff]
      %v590 = vld [vmem:[%s549 + $0xd8] sm:$0xff]
      %v591 = vld [vmem:[%s549 + $0xe0] sm:$0xff]
      %v592 = vld [vmem:[%s549 + $0xe8] sm:$0xff]
      %v593 = vld [vmem:[%s549 + $0xf0] sm:$0xff]
      %v594 = vld [vmem:[%s549 + $0xf8] sm:$0xff]
      %v595 = vld [vmem:[%s5] sm:$0xff]
      %v596 = vld [vmem:[%s5 + $0x8] sm:$0xff]
      %v597 = vld [vmem:[%s5 + $0x10] sm:$0xf]
      %599 = vset.pattern.permute.xlu0 0
      %600 = vperm.xlu0 %599, %v595
      %v601 = vpop.permute.xlu0 %600
      %604 = vset.pattern.permute.xlu0 0
      %605 = vperm.xlu0 %604, %v596
      %v606 = vpop.permute.xlu0 %605
      %609 = vset.pattern.permute.xlu0 0
      %610 = vperm.xlu0 %609, %v597
      %v611 = vpop.permute.xlu0 %610
      %vm613 = vcmask 31744
      %v615 = vsel %vm613, %v560, 0
      %v618 = vsel %vm613, %v561, 0
      %v621 = vsel %vm613, %v562, 0
      %v624 = vsel %vm613, %v563, 0
      %v627 = vsel %vm613, %v564, 0
      %v630 = vsel %vm613, %v565, 0
      %v633 = vsel %vm613, %v566, 0
      %v636 = vsel %vm613, %v567, 0
      %v639 = vsel %vm613, %v568, 0
      %v642 = vsel %vm613, %v569, 0
      %v645 = vsel %vm613, %v570, 0
      %v648 = vsel %vm613, %v571, 0
      %v651 = vsel %vm613, %v572, 0
      %v654 = vsel %vm613, %v573, 0
      %v657 = vsel %vm613, %v574, 0
      %v660 = vsel %vm613, %v575, 0
      %v663 = vsel %vm613, %v576, 0
      %v666 = vsel %vm613, %v577, 0
      %v669 = vsel %vm613, %v578, 0
      %v672 = vsel %vm613, %v579, 0
      %v675 = vsel %vm613, %v580, 0
      %v678 = vsel %vm613, %v581, 0
      %v681 = vsel %vm613, %v582, 0
      %v684 = vsel %vm613, %v583, 0
      %v687 = vsel %vm613, %v584, 0
      %v690 = vsel %vm613, %v585, 0
      %v693 = vsel %vm613, %v586, 0
      %v696 = vsel %vm613, %v587, 0
      %v699 = vsel %vm613, %v588, 0
      %v702 = vsel %vm613, %v589, 0
      %v705 = vsel %vm613, %v590, 0
      %v708 = vsel %vm613, %v591, 0
      %v711 = vsel %vm613, %v592, 0
      %v714 = vsel %vm613, %v593, 0
      %v717 = vsel %vm613, %v594, 0
      %719 = vmatpush.xpose.msra.mxu0 %v669
      %720 = vmatpush.xpose.msra.mxu0 %v666
      %721 = vmatpush.xpose.msra.mxu0 %v663
      %722 = vmatpush.xpose.msra.mxu0 %v660
      %723 = vmatpush.xpose.msra.mxu0 %v657
      %724 = vmatpush.xpose.msra.mxu0 %v654
      %725 = vmatpush.xpose.msra.mxu0 %v651
      %726 = vmatpush.xpose.msra.mxu0 %v648
      %727 = vmatpush.xpose.msra.mxu0 %v645
      %728 = vmatpush.xpose.msra.mxu0 %v642
      %729 = vmatpush.xpose.msra.mxu0 %v639
      %730 = vmatpush.xpose.msra.mxu0 %v636
      %731 = vmatpush.xpose.msra.mxu0 %v633
      %732 = vmatpush.xpose.msra.mxu0 %v630
      %733 = vmatpush.xpose.msra.mxu0 %v627
      %734 = vmatpush.xpose.msra.mxu0 %v624
      %735 = vmatmul.f32.gmra.mxu0 %v615
      %v736 = vpop.f32.mrf.mxu0
      %v737 = vadd.f32 %v601, %v736
      %738 = vmatmul.f32.gmra.mxu0 %v618
      %v739 = vpop.f32.mrf.mxu0
      %v740 = vadd.f32 %v606, %v739
      %741 = vmatmul.f32.gmra.mxu0 %v621
      %v742 = vpop.f32.mrf.mxu0
      %v743 = vadd.f32 %v611, %v742
      %744 = vdwg.mxu0
      %745 = vmatpush.xpose.msra.mxu0 %v717
      %746 = vmatpush.xpose.msra.mxu0 %v714
      %747 = vmatpush.xpose.msra.mxu0 %v711
      %748 = vmatpush.xpose.msra.mxu0 %v708
      %749 = vmatpush.xpose.msra.mxu0 %v705
      %750 = vmatpush.xpose.msra.mxu0 %v702
      %751 = vmatpush.xpose.msra.mxu0 %v699
      %752 = vmatpush.xpose.msra.mxu0 %v696
      %753 = vmatpush.xpose.msra.mxu0 %v693
      %754 = vmatpush.xpose.msra.mxu0 %v690
      %755 = vmatpush.xpose.msra.mxu0 %v687
      %756 = vmatpush.xpose.msra.mxu0 %v684
      %757 = vmatpush.xpose.msra.mxu0 %v681
      %758 = vmatpush.xpose.msra.mxu0 %v678
      %759 = vmatpush.xpose.msra.mxu0 %v675
      %760 = vmatpush.xpose.msra.mxu0 %v672
      %761 = vmatmul.f32.gmra.mxu0 %v615
      %v762 = vpop.f32.mrf.mxu0
      %v763 = vadd.f32 %v601, %v762
      %764 = vmatmul.f32.gmra.mxu0 %v618
      %v765 = vpop.f32.mrf.mxu0
      %v766 = vadd.f32 %v606, %v765
      %767 = vmatmul.f32.gmra.mxu0 %v621
      %v768 = vpop.f32.mrf.mxu0
      %v769 = vadd.f32 %v611, %v768
      %770 = vdwg.mxu0
      %v771 = vmax.f32 %v737, 0.0
      %v772 = vmax.f32 %v763, 0.0
      %v773 = vmax.f32 %v740, 0.0
      %v774 = vmax.f32 %v766, 0.0
      %v775 = vmax.f32 %v743, 0.0
      %v776 = vmax.f32 %v769, 0.0
      %v777 = vld [vmem:[%s2] sm:$0xff]
      %v778 = vld [vmem:[%s2 + $0x8] sm:$0xff]
      %v779 = vld [vmem:[%s2 + $0x10] sm:$0xf]
      %v780 = vld [vmem:[%s535] sm:$0xff]
      %v781 = vld [vmem:[%s535 + $0x8] sm:$0xff]
      %v782 = vld [vmem:[%s535 + $0x10] sm:$0xff]
      %v783 = vld [vmem:[%s535 + $0x18] sm:$0xff]
      %v784 = vld [vmem:[%s535 + $0x20] sm:$0xff]
      %v785 = vld [vmem:[%s535 + $0x28] sm:$0xff]
      %v786 = vld [vmem:[%s535 + $0x30] sm:$0xff]
      %v787 = vld [vmem:[%s535 + $0x38] sm:$0xff]
      %v788 = vld [vmem:[%s535 + $0x40] sm:$0xff]
      %v789 = vld [vmem:[%s535 + $0x48] sm:$0xff]
      %v790 = vld [vmem:[%s535 + $0x50] sm:$0xff]
      %v791 = vld [vmem:[%s535 + $0x58] sm:$0xff]
      %v792 = vld [vmem:[%s535 + $0x60] sm:$0xff]
      %v793 = vld [vmem:[%s535 + $0x68] sm:$0xff]
      %v794 = vld [vmem:[%s535 + $0x70] sm:$0xff]
      %v795 = vld [vmem:[%s535 + $0x78] sm:$0xff]
      %v796 = vld [vmem:[%s535 + $0x80] sm:$0xff]
      %v797 = vld [vmem:[%s535 + $0x88] sm:$0xff]
      %v798 = vld [vmem:[%s535 + $0x90] sm:$0xff]
      %v799 = vld [vmem:[%s535 + $0x98] sm:$0xff]
      %v800 = vld [vmem:[%s535 + $0xa0] sm:$0xff]
      %v801 = vld [vmem:[%s535 + $0xa8] sm:$0xff]
      %v802 = vld [vmem:[%s535 + $0xb0] sm:$0xff]
      %v803 = vld [vmem:[%s535 + $0xb8] sm:$0xff]
      %v804 = vld [vmem:[%s535 + $0xc0] sm:$0xff]
      %v805 = vld [vmem:[%s535 + $0xc8] sm:$0xff]
      %v806 = vld [vmem:[%s535 + $0xd0] sm:$0xff]
      %v807 = vld [vmem:[%s535 + $0xd8] sm:$0xff]
      %v808 = vld [vmem:[%s535 + $0xe0] sm:$0xff]
      %v809 = vld [vmem:[%s535 + $0xe8] sm:$0xff]
      %v810 = vld [vmem:[%s535 + $0xf0] sm:$0xff]
      %v811 = vld [vmem:[%s535 + $0xf8] sm:$0xff]
      %v812 = vld [vmem:[%s3] sm:$0xff]
      %v813 = vld [vmem:[%s3 + $0x8] sm:$0xff]
      %v814 = vld [vmem:[%s3 + $0x10] sm:$0xf]
      %816 = vset.pattern.permute.xlu0 0
      %817 = vperm.xlu0 %816, %v812
      %v818 = vpop.permute.xlu0 %817
      %821 = vset.pattern.permute.xlu0 0
      %822 = vperm.xlu0 %821, %v813
      %v823 = vpop.permute.xlu0 %822
      %826 = vset.pattern.permute.xlu0 0
      %827 = vperm.xlu0 %826, %v814
      %v828 = vpop.permute.xlu0 %827
      %vm830 = vcmask 64512
      %v832 = vsel %vm830, %v777, 0
      %v835 = vsel %vm830, %v778, 0
      %v838 = vsel %vm830, %v779, 0
      %v841 = vsel %vm830, %v780, 0
      %v844 = vsel %vm830, %v781, 0
      %v847 = vsel %vm830, %v782, 0
      %v850 = vsel %vm830, %v783, 0
      %v853 = vsel %vm830, %v784, 0
      %v856 = vsel %vm830, %v785, 0
      %v859 = vsel %vm830, %v786, 0
      %v862 = vsel %vm830, %v787, 0
      %v865 = vsel %vm830, %v788, 0
      %v868 = vsel %vm830, %v789, 0
      %v871 = vsel %vm830, %v790, 0
      %v874 = vsel %vm830, %v791, 0
      %v877 = vsel %vm830, %v792, 0
      %v880 = vsel %vm830, %v793, 0
      %v883 = vsel %vm830, %v794, 0
      %v886 = vsel %vm830, %v795, 0
      %v889 = vsel %vm830, %v796, 0
      %v892 = vsel %vm830, %v797, 0
      %v895 = vsel %vm830, %v798, 0
      %v898 = vsel %vm830, %v799, 0
      %v901 = vsel %vm830, %v800, 0
      %v904 = vsel %vm830, %v801, 0
      %v907 = vsel %vm830, %v802, 0
      %v910 = vsel %vm830, %v803, 0
      %v913 = vsel %vm830, %v804, 0
      %v916 = vsel %vm830, %v805, 0
      %v919 = vsel %vm830, %v806, 0
      %v922 = vsel %vm830, %v807, 0
      %v925 = vsel %vm830, %v808, 0
      %v928 = vsel %vm830, %v809, 0
      %v931 = vsel %vm830, %v810, 0
      %v934 = vsel %vm830, %v811, 0
      %936 = vmatpush.xpose.msra.mxu0 %v886
      %937 = vmatpush.xpose.msra.mxu0 %v883
      %938 = vmatpush.xpose.msra.mxu0 %v880
      %939 = vmatpush.xpose.msra.mxu0 %v877
      %940 = vmatpush.xpose.msra.mxu0 %v874
      %941 = vmatpush.xpose.msra.mxu0 %v871
      %942 = vmatpush.xpose.msra.mxu0 %v868
      %943 = vmatpush.xpose.msra.mxu0 %v865
      %944 = vmatpush.xpose.msra.mxu0 %v862
      %945 = vmatpush.xpose.msra.mxu0 %v859
      %946 = vmatpush.xpose.msra.mxu0 %v856
      %947 = vmatpush.xpose.msra.mxu0 %v853
      %948 = vmatpush.xpose.msra.mxu0 %v850
      %949 = vmatpush.xpose.msra.mxu0 %v847
      %950 = vmatpush.xpose.msra.mxu0 %v844
      %951 = vmatpush.xpose.msra.mxu0 %v841
      %952 = vmatmul.f32.gmra.mxu0 %v832
      %v953 = vpop.f32.mrf.mxu0
      %v954 = vadd.f32 %v818, %v953
      %955 = vmatmul.f32.gmra.mxu0 %v835
      %v956 = vpop.f32.mrf.mxu0
      %v957 = vadd.f32 %v823, %v956
      %958 = vmatmul.f32.gmra.mxu0 %v838
      %v959 = vpop.f32.mrf.mxu0
      %v960 = vadd.f32 %v828, %v959
      %961 = vdwg.mxu0
      %962 = vmatpush.xpose.msra.mxu0 %v934
      %963 = vmatpush.xpose.msra.mxu0 %v931
      %964 = vmatpush.xpose.msra.mxu0 %v928
      %965 = vmatpush.xpose.msra.mxu0 %v925
      %966 = vmatpush.xpose.msra.mxu0 %v922
      %967 = vmatpush.xpose.msra.mxu0 %v919
      %968 = vmatpush.xpose.msra.mxu0 %v916
      %969 = vmatpush.xpose.msra.mxu0 %v913
      %970 = vmatpush.xpose.msra.mxu0 %v910
      %971 = vmatpush.xpose.msra.mxu0 %v907
      %972 = vmatpush.xpose.msra.mxu0 %v904
      %973 = vmatpush.xpose.msra.mxu0 %v901
      %974 = vmatpush.xpose.msra.mxu0 %v898
      %975 = vmatpush.xpose.msra.mxu0 %v895
      %976 = vmatpush.xpose.msra.mxu0 %v892
      %977 = vmatpush.xpose.msra.mxu0 %v889
      %978 = vmatmul.f32.gmra.mxu0 %v832
      %v979 = vpop.f32.mrf.mxu0
      %v980 = vadd.f32 %v818, %v979
      %981 = vmatmul.f32.gmra.mxu0 %v835
      %v982 = vpop.f32.mrf.mxu0
      %v983 = vadd.f32 %v823, %v982
      %984 = vmatmul.f32.gmra.mxu0 %v838
      %v985 = vpop.f32.mrf.mxu0
      %v986 = vadd.f32 %v828, %v985
      %987 = vdwg.mxu0
      %v988 = vmax.f32 %v954, 0.0
      %v989 = vmax.f32 %v980, 0.0
      %v990 = vmax.f32 %v957, 0.0
      %v991 = vmax.f32 %v983, 0.0
      %v992 = vmax.f32 %v960, 0.0
      %v993 = vmax.f32 %v986, 0.0
      %v994 = vld [vmem:[%s6] sm:$0xff]
      %v995 = vld [vmem:[%s6 + $0x8] sm:$0xff]
      %v996 = vld [vmem:[%s6 + $0x10] sm:$0xf]
      %v997 = vld [vmem:[%s7] sm:$0xff]
      %v998 = vld [vmem:[%s7 + $0x8] sm:$0xff]
      %v999 = vld [vmem:[%s7 + $0x10] sm:$0xf]
      %1001 = vset.pattern.permute.xlu0 0
      %1002 = vperm.xlu0 %1001, %v997
      %v1003 = vpop.permute.xlu0 %1002
      %1006 = vset.pattern.permute.xlu0 0
      %1007 = vperm.xlu0 %1006, %v998
      %v1008 = vpop.permute.xlu0 %1007
      %1011 = vset.pattern.permute.xlu0 0
      %1012 = vperm.xlu0 %1011, %v999
      %v1013 = vpop.permute.xlu0 %1012
      %vm1015 = vcmask 162816
      %v1017 = vsel %vm1015, %v994, 0
      %v1020 = vsel %vm1015, %v995, 0
      %v1023 = vsel %vm1015, %v996, 0
      %vm1025 = vcmask 1043456
      %v1027 = vsel %vm1025, %v992, 0
      %v1030 = vsel %vm1025, %v993, 0
      %1032 = vmatpush.msra.mxu0 0.0
      %1033 = vmatpush.msra.mxu0 0.0
      %1034 = vmatpush.msra.mxu0 0.0
      %1035 = vmatpush.msra.mxu0 0.0
      %1036 = vmatpush.msra.mxu0 0.0
      %1037 = vmatpush.msra.mxu0 0.0
      %1038 = vmatpush.msra.mxu0 0.0
      %1039 = vmatpush.msra.mxu0 0.0
      %1040 = vmatpush.msra.mxu0 0.0
      %1041 = vmatpush.msra.mxu0 0.0
      %1042 = vmatpush.msra.mxu0 0.0
      %1043 = vmatpush.msra.mxu0 0.0
      %1044 = vmatpush.msra.mxu0 0.0
      %1045 = vmatpush.msra.mxu0 %v1027
      %1046 = vmatpush.msra.mxu0 %v990
      %1047 = vmatpush.msra.mxu0 %v988
      %1048 = vmatmul.f32.gmra.mxu0 %v1017
      %v1049 = vpop.f32.mrf.mxu0
      %v1050 = vadd.f32 %v1003, %v1049
      %1051 = vmatmul.f32.gmra.mxu0 %v1020
      %v1052 = vpop.f32.mrf.mxu0
      %v1053 = vadd.f32 %v1008, %v1052
      %1054 = vmatmul.f32.gmra.mxu0 %v1023
      %v1055 = vpop.f32.mrf.mxu0
      %v1056 = vadd.f32 %v1013, %v1055
      %1057 = vdwg.mxu0
      %1058 = vmatpush.msra.mxu0 0.0
      %1059 = vmatpush.msra.mxu0 0.0
      %1060 = vmatpush.msra.mxu0 0.0
      %1061 = vmatpush.msra.mxu0 0.0
      %1062 = vmatpush.msra.mxu0 0.0
      %1063 = vmatpush.msra.mxu0 0.0
      %1064 = vmatpush.msra.mxu0 0.0
      %1065 = vmatpush.msra.mxu0 0.0
      %1066 = vmatpush.msra.mxu0 0.0
      %1067 = vmatpush.msra.mxu0 0.0
      %1068 = vmatpush.msra.mxu0 0.0
      %1069 = vmatpush.msra.mxu0 0.0
      %1070 = vmatpush.msra.mxu0 0.0
      %1071 = vmatpush.msra.mxu0 %v1030
      %1072 = vmatpush.msra.mxu0 %v991
      %1073 = vmatpush.msra.mxu0 %v989
      %1074 = vmatmul.f32.gmra.mxu0 %v1017
      %v1075 = vpop.f32.mrf.mxu0
      %v1076 = vadd.f32 %v1003, %v1075
      %1077 = vmatmul.f32.gmra.mxu0 %v1020
      %v1078 = vpop.f32.mrf.mxu0
      %v1079 = vadd.f32 %v1008, %v1078
      %1080 = vmatmul.f32.gmra.mxu0 %v1023
      %v1081 = vpop.f32.mrf.mxu0
      %v1082 = vadd.f32 %v1013, %v1081
      %1083 = vdwg.mxu0
      %v1084 = vmax.f32 %v1050, 0.0
      %v1085 = vmax.f32 %v1076, 0.0
      %v1086 = vmax.f32 %v1053, 0.0
      %v1087 = vmax.f32 %v1079, 0.0
      %v1088 = vmax.f32 %v1056, 0.0
      %v1089 = vmax.f32 %v1082, 0.0
      %v1090 = vld [vmem:[%s8] sm:$0xff]
      %v1091 = vld [vmem:[%s8 + $0x8] sm:$0xff]
      %v1092 = vld [vmem:[%s8 + $0x10] sm:$0xf]
      %v1093 = vld [vmem:[%s9] sm:$0xff]
      %v1094 = vld [vmem:[%s9 + $0x8] sm:$0xff]
      %v1095 = vld [vmem:[%s9 + $0x10] sm:$0xf]
      %v1097 = vsel %vm1015, %v1093, 0
      %v1100 = vsel %vm1015, %v1094, 0
      %v1103 = vsel %vm1015, %v1095, 0
      %v1106 = vsel %vm1025, %v775, 0
      %v1109 = vsel %vm1025, %v776, 0
      %1111 = vmatpush.msra.mxu0 0.0
      %1112 = vmatpush.msra.mxu0 0.0
      %1113 = vmatpush.msra.mxu0 0.0
      %1114 = vmatpush.msra.mxu0 0.0
      %1115 = vmatpush.msra.mxu0 0.0
      %1116 = vmatpush.msra.mxu0 0.0
      %1117 = vmatpush.msra.mxu0 0.0
      %1118 = vmatpush.msra.mxu0 0.0
      %1119 = vmatpush.msra.mxu0 0.0
      %1120 = vmatpush.msra.mxu0 0.0
      %1121 = vmatpush.msra.mxu0 0.0
      %1122 = vmatpush.msra.mxu0 0.0
      %1123 = vmatpush.msra.mxu0 0.0
      %1124 = vmatpush.msra.mxu0 %v1106
      %1125 = vmatpush.msra.mxu0 %v773
      %1126 = vmatpush.msra.mxu0 %v771
      %1127 = vmatmul.f32.gmra.mxu0 %v1097
      %v1128 = vpop.f32.mrf.mxu0
      %v1129 = vadd.f32 0.0, %v1128
      %1130 = vmatmul.f32.gmra.mxu0 %v1100
      %v1131 = vpop.f32.mrf.mxu0
      %v1132 = vadd.f32 0.0, %v1131
      %1133 = vmatmul.f32.gmra.mxu0 %v1103
      %v1134 = vpop.f32.mrf.mxu0
      %v1135 = vadd.f32 0.0, %v1134
      %1136 = vdwg.mxu0
      %1137 = vmatpush.msra.mxu0 0.0
      %1138 = vmatpush.msra.mxu0 0.0
      %1139 = vmatpush.msra.mxu0 0.0
      %1140 = vmatpush.msra.mxu0 0.0
      %1141 = vmatpush.msra.mxu0 0.0
      %1142 = vmatpush.msra.mxu0 0.0
      %1143 = vmatpush.msra.mxu0 0.0
      %1144 = vmatpush.msra.mxu0 0.0
      %1145 = vmatpush.msra.mxu0 0.0
      %1146 = vmatpush.msra.mxu0 0.0
      %1147 = vmatpush.msra.mxu0 0.0
      %1148 = vmatpush.msra.mxu0 0.0
      %1149 = vmatpush.msra.mxu0 0.0
      %1150 = vmatpush.msra.mxu0 %v1109
      %1151 = vmatpush.msra.mxu0 %v774
      %1152 = vmatpush.msra.mxu0 %v772
      %1153 = vmatmul.f32.gmra.mxu0 %v1097
      %v1154 = vpop.f32.mrf.mxu0
      %v1155 = vadd.f32 0.0, %v1154
      %1156 = vmatmul.f32.gmra.mxu0 %v1100
      %v1157 = vpop.f32.mrf.mxu0
      %v1158 = vadd.f32 0.0, %v1157
      %1159 = vmatmul.f32.gmra.mxu0 %v1103
      %v1160 = vpop.f32.mrf.mxu0
      %v1161 = vadd.f32 0.0, %v1160
      %1162 = vdwg.mxu0
      %v1164 = vsel %vm1015, %v1090, 0
      %v1167 = vsel %vm1015, %v1091, 0
      %v1170 = vsel %vm1015, %v1092, 0
      %v1173 = vsel %vm1025, %v1088, 0
      %v1176 = vsel %vm1025, %v1089, 0
      %1178 = vmatpush.msra.mxu0 0.0
      %1179 = vmatpush.msra.mxu0 0.0
      %1180 = vmatpush.msra.mxu0 0.0
      %1181 = vmatpush.msra.mxu0 0.0
      %1182 = vmatpush.msra.mxu0 0.0
      %1183 = vmatpush.msra.mxu0 0.0
      %1184 = vmatpush.msra.mxu0 0.0
      %1185 = vmatpush.msra.mxu0 0.0
      %1186 = vmatpush.msra.mxu0 0.0
      %1187 = vmatpush.msra.mxu0 0.0
      %1188 = vmatpush.msra.mxu0 0.0
      %1189 = vmatpush.msra.mxu0 0.0
      %1190 = vmatpush.msra.mxu0 0.0
      %1191 = vmatpush.msra.mxu0 %v1173
      %1192 = vmatpush.msra.mxu0 %v1086
      %1193 = vmatpush.msra.mxu0 %v1084
      %1194 = vmatmul.f32.gmra.mxu0 %v1164
      %v1195 = vpop.f32.mrf.mxu0
      %v1196 = vadd.f32 %v1129, %v1195
      %1197 = vmatmul.f32.gmra.mxu0 %v1167
      %v1198 = vpop.f32.mrf.mxu0
      %v1199 = vadd.f32 %v1132, %v1198
      %1200 = vmatmul.f32.gmra.mxu0 %v1170
      %v1201 = vpop.f32.mrf.mxu0
      %v1202 = vadd.f32 %v1135, %v1201
      %1203 = vdwg.mxu0
      %1204 = vmatpush.msra.mxu0 0.0
      %1205 = vmatpush.msra.mxu0 0.0
      %1206 = vmatpush.msra.mxu0 0.0
      %1207 = vmatpush.msra.mxu0 0.0
      %1208 = vmatpush.msra.mxu0 0.0
      %1209 = vmatpush.msra.mxu0 0.0
      %1210 = vmatpush.msra.mxu0 0.0
      %1211 = vmatpush.msra.mxu0 0.0
      %1212 = vmatpush.msra.mxu0 0.0
      %1213 = vmatpush.msra.mxu0 0.0
      %1214 = vmatpush.msra.mxu0 0.0
      %1215 = vmatpush.msra.mxu0 0.0
      %1216 = vmatpush.msra.mxu0 0.0
      %1217 = vmatpush.msra.mxu0 %v1176
      %1218 = vmatpush.msra.mxu0 %v1087
      %1219 = vmatpush.msra.mxu0 %v1085
      %1220 = vmatmul.f32.gmra.mxu0 %v1164
      %v1221 = vpop.f32.mrf.mxu0
      %v1222 = vadd.f32 %v1155, %v1221
      %1223 = vmatmul.f32.gmra.mxu0 %v1167
      %v1224 = vpop.f32.mrf.mxu0
      %v1225 = vadd.f32 %v1158, %v1224
      %1226 = vmatmul.f32.gmra.mxu0 %v1170
      %v1227 = vpop.f32.mrf.mxu0
      %v1228 = vadd.f32 %v1161, %v1227
      %1229 = vdwg.mxu0
      %v1230 = vld [vmem:[%s10] sm:$0xff]
      %v1231 = vld [vmem:[%s10 + $0x8] sm:$0xff]
      %v1232 = vld [vmem:[%s10 + $0x10] sm:$0xf]
      %1234 = vset.pattern.permute.xlu0 0
      %1235 = vperm.xlu0 %1234, %v1230
      %v1236 = vpop.permute.xlu0 %1235
      %1239 = vset.pattern.permute.xlu0 0
      %1240 = vperm.xlu0 %1239, %v1231
      %v1241 = vpop.permute.xlu0 %1240
      %1244 = vset.pattern.permute.xlu0 0
      %1245 = vperm.xlu0 %1244, %v1232
      %v1246 = vpop.permute.xlu0 %1245
      %v1248 = vadd.f32 %v1196, %v1236
      %v1249 = vadd.f32 %v1222, %v1236
      %v1250 = vadd.f32 %v1199, %v1241
      %v1251 = vadd.f32 %v1225, %v1241
      %v1252 = vadd.f32 %v1202, %v1246
      %v1253 = vadd.f32 %v1228, %v1246
      %v1254 = vmax.f32 %v1248, 0.0
      %v1255 = vmax.f32 %v1249, 0.0
      %v1256 = vmax.f32 %v1250, 0.0
      %v1257 = vmax.f32 %v1251, 0.0
      %v1258 = vmax.f32 %v1252, 0.0
      %v1259 = vmax.f32 %v1253, 0.0
      %v1260 = vld [vmem:[%s11] sm:$0xff]
      %v1261 = vld [vmem:[%s11 + $0x8] sm:$0xff]
      %v1262 = vld [vmem:[%s11 + $0x10] sm:$0xf]
      %v1263 = vld [vmem:[%s12] sm:$0xff]
      %v1264 = vld [vmem:[%s12 + $0x8] sm:$0xff]
      %v1265 = vld [vmem:[%s12 + $0x10] sm:$0xf]
      %1267 = vset.pattern.permute.xlu0 0
      %1268 = vperm.xlu0 %1267, %v1263
      %v1269 = vpop.permute.xlu0 %1268
      %1272 = vset.pattern.permute.xlu0 0
      %1273 = vperm.xlu0 %1272, %v1264
      %v1274 = vpop.permute.xlu0 %1273
      %1277 = vset.pattern.permute.xlu0 0
      %1278 = vperm.xlu0 %1277, %v1265
      %v1279 = vpop.permute.xlu0 %1278
      %v1282 = vsel %vm1015, %v1260, 0
      %v1285 = vsel %vm1015, %v1261, 0
      %v1288 = vsel %vm1015, %v1262, 0
      %v1291 = vsel %vm1025, %v1258, 0
      %v1294 = vsel %vm1025, %v1259, 0
      %1296 = vmatpush.msra.mxu0 0.0
      %1297 = vmatpush.msra.mxu0 0.0
      %1298 = vmatpush.msra.mxu0 0.0
      %1299 = vmatpush.msra.mxu0 0.0
      %1300 = vmatpush.msra.mxu0 0.0
      %1301 = vmatpush.msra.mxu0 0.0
      %1302 = vmatpush.msra.mxu0 0.0
      %1303 = vmatpush.msra.mxu0 0.0
      %1304 = vmatpush.msra.mxu0 0.0
      %1305 = vmatpush.msra.mxu0 0.0
      %1306 = vmatpush.msra.mxu0 0.0
      %1307 = vmatpush.msra.mxu0 0.0
      %1308 = vmatpush.msra.mxu0 0.0
      %1309 = vmatpush.msra.mxu0 %v1291
      %1310 = vmatpush.msra.mxu0 %v1256
      %1311 = vmatpush.msra.mxu0 %v1254
      %1312 = vmatmul.f32.gmra.mxu0 %v1282
      %v1313 = vpop.f32.mrf.mxu0
      %v1314 = vadd.f32 %v1269, %v1313
      %1315 = vmatmul.f32.gmra.mxu0 %v1285
      %v1316 = vpop.f32.mrf.mxu0
      %v1317 = vadd.f32 %v1274, %v1316
      %1318 = vmatmul.f32.gmra.mxu0 %v1288
      %v1319 = vpop.f32.mrf.mxu0
      %v1320 = vadd.f32 %v1279, %v1319
      %1321 = vdwg.mxu0
      %1322 = vmatpush.msra.mxu0 0.0
      %1323 = vmatpush.msra.mxu0 0.0
      %1324 = vmatpush.msra.mxu0 0.0
      %1325 = vmatpush.msra.mxu0 0.0
      %1326 = vmatpush.msra.mxu0 0.0
      %1327 = vmatpush.msra.mxu0 0.0
      %1328 = vmatpush.msra.mxu0 0.0
      %1329 = vmatpush.msra.mxu0 0.0
      %1330 = vmatpush.msra.mxu0 0.0
      %1331 = vmatpush.msra.mxu0 0.0
      %1332 = vmatpush.msra.mxu0 0.0
      %1333 = vmatpush.msra.mxu0 0.0
      %1334 = vmatpush.msra.mxu0 0.0
      %1335 = vmatpush.msra.mxu0 %v1294
      %1336 = vmatpush.msra.mxu0 %v1257
      %1337 = vmatpush.msra.mxu0 %v1255
      %1338 = vmatmul.f32.gmra.mxu0 %v1282
      %v1339 = vpop.f32.mrf.mxu0
      %v1340 = vadd.f32 %v1269, %v1339
      %1341 = vmatmul.f32.gmra.mxu0 %v1285
      %v1342 = vpop.f32.mrf.mxu0
      %v1343 = vadd.f32 %v1274, %v1342
      %1344 = vmatmul.f32.gmra.mxu0 %v1288
      %v1345 = vpop.f32.mrf.mxu0
      %v1346 = vadd.f32 %v1279, %v1345
      %1347 = vdwg.mxu0
      %v1348 = vmax.f32 %v1314, 0.0
      %v1349 = vmax.f32 %v1340, 0.0
      %v1350 = vmax.f32 %v1317, 0.0
      %v1351 = vmax.f32 %v1343, 0.0
      %v1352 = vmax.f32 %v1320, 0.0
      %v1353 = vmax.f32 %v1346, 0.0
      %v1354 = vld [vmem:[%s13] sm:$0x1]
      %v1355 = vld [vmem:[#allocation2] sm:$0x1]
      %1357 = vset.pattern.permute.xlu0 0
      %1358 = vperm.xlu0 %1357, %v1355
      %v1359 = vpop.permute.xlu0 %1358
      %v1361 = vperm.slane %v1359, 0
      %v1363 = vsel %vm1015, %v1354, 0
      %v1366 = vsel %vm1025, %v1352, 0
      %v1369 = vsel %vm1025, %v1353, 0
      %1371 = vmatpush.msra.mxu0 0.0
      %1372 = vmatpush.msra.mxu0 0.0
      %1373 = vmatpush.msra.mxu0 0.0
      %1374 = vmatpush.msra.mxu0 0.0
      %1375 = vmatpush.msra.mxu0 0.0
      %1376 = vmatpush.msra.mxu0 0.0
      %1377 = vmatpush.msra.mxu0 0.0
      %1378 = vmatpush.msra.mxu0 0.0
      %1379 = vmatpush.msra.mxu0 0.0
      %1380 = vmatpush.msra.mxu0 0.0
      %1381 = vmatpush.msra.mxu0 0.0
      %1382 = vmatpush.msra.mxu0 0.0
      %1383 = vmatpush.msra.mxu0 0.0
      %1384 = vmatpush.msra.mxu0 %v1366
      %1385 = vmatpush.msra.mxu0 %v1350
      %1386 = vmatpush.msra.mxu0 %v1348
      %1387 = vmatmul.f32.gmra.mxu0 %v1363
      %v1388 = vpop.f32.mrf.mxu0
      %v1389 = vadd.f32 %v1361, %v1388
      %1390 = vdwg.mxu0
      %1391 = vmatpush.msra.mxu0 0.0
      %1392 = vmatpush.msra.mxu0 0.0
      %1393 = vmatpush.msra.mxu0 0.0
      %1394 = vmatpush.msra.mxu0 0.0
      %1395 = vmatpush.msra.mxu0 0.0
      %1396 = vmatpush.msra.mxu0 0.0
      %1397 = vmatpush.msra.mxu0 0.0
      %1398 = vmatpush.msra.mxu0 0.0
      %1399 = vmatpush.msra.mxu0 0.0
      %1400 = vmatpush.msra.mxu0 0.0
      %1401 = vmatpush.msra.mxu0 0.0
      %1402 = vmatpush.msra.mxu0 0.0
      %1403 = vmatpush.msra.mxu0 0.0
      %1404 = vmatpush.msra.mxu0 %v1369
      %1405 = vmatpush.msra.mxu0 %v1351
      %1406 = vmatpush.msra.mxu0 %v1349
      %1407 = vmatmul.f32.gmra.mxu0 %v1363
      %v1408 = vpop.f32.mrf.mxu0
      %v1409 = vadd.f32 %v1361, %v1408
      %1410 = vdwg.mxu0
      %v1413 = vrot.slane %v1409, 7
      %vm1414 = vcmask 1040384
      %v1415 = vsel %vm1414, %v1389, %v1413
      %v1417 = vlaneseq
      %vm1418 = vcmp.ge.s32.totalorder %v1417, 0
      %vm1419 = vcmp.lt.s32.totalorder %v1417, 256
      %vm1420 = vmand %vm1418, %vm1419
      %1421 = vst.msk [vmem:[%s558] sm:$0x3] %vm1420, %v1415
      %s1422 = smul.u32 2, %s28
      %p1423 = scmp.lt.s32.totalorder %s1422, 7
      %s1424 = scalar_select %p1423, %s1422, 7
      %s1425 = scalar_lea.vmem %s15, %s1424
      // Predicated region
      $region81: #{critic_forward.1} parent=79 // pred_check
        %p1426 = pneg %p371
      $region82: #{critic_forward.1} parent=79 // pred_check_branch
        %1428 = sbr.rel (%p1426) target = $region84
      $region83: #{critic_forward.1} parent=79 // pred_region
        %s1429 = smul.u32 2, %s28
      $region84: #{critic_forward.1} parent=79 // pred_fallthru
        _
    $region80: #{critic_forward.1} parent=5 // pred_fallthru
      _
    %p1430 = scmp.le.s32.totalorder 2, %s23
    // Predicated region
    $region85: #{critic_forward.1} parent=5 // pred_check
      %p1431 = pneg %p1430
    $region86: #{critic_forward.1} parent=5 // pred_check_branch
      %1433 = sbr.rel (%p1431) target = $region88
    $region87: #{critic_forward.1} parent=5 // pred_region
      %s1434 = ssub.s32 %s23, 2
      // Predicated region
      $region89: #{critic_forward.1} parent=87 // pred_check
        %p1435 = pneg %p377
      $region90: #{critic_forward.1} parent=87 // pred_check_branch
        %1437 = sbr.rel (%p1435) target = $region92
      $region91: #{critic_forward.1} parent=87 // pred_region
        %s1438 = smul.u32 2, %s29
        %p1439 = scmp.lt.s32.totalorder %s1438, 7
        %s1440 = scalar_select %p1439, %s1438, 7
        %s1441 = scalar_lea.vmem %s15, %s1440
      $region92: #{critic_forward.1} parent=87 // pred_fallthru
        _
    $region88: #{critic_forward.1} parent=5 // pred_fallthru
      _
  $region6: #{critic_forward.1} parent=0 // loop_footer
    %s27 = sadd.s32 1, %s23
  $region7: #{critic_forward.1} parent=0 // loop_footer_branch
    %22 = sbr.rel target = $region3
  $region8: #{critic_forward.1} parent=0 // loop_exit
    _

</llo_original>
